<compile_context>
chip_gen: v7x
topology: tpu7x:2x2x1
jax: 0.10.0
libtpu: 0.0.40
codegen_flags: <defaults>
</compile_context>

<pallas_src>
import jax
import jax.numpy as jnp
import numpy as np
from jax.experimental import pallas as pl
from jax.experimental.pallas import tpu as pltpu


# ----------------------------------------------------------------------------
# Primary path: pure identity (zero cost — no custom call at all).
# ----------------------------------------------------------------------------
def mock_joint_block_forward(context, x, c=None, params=None):
    """MockJointBlock.forward: pure pass-through of (context, x).

    Exactly like the PyTorch module, `c` and the unused Linear(1, 1)
    parameters do not affect the output.  Returning the inputs directly is
    free at trace time and lets XLA elide the op completely; no Pallas
    custom-call boundary (and therefore no launch overhead or fusion
    barrier) is introduced.
    """
    del c, params  # unused, matching the reference forward
    return context, x


# ----------------------------------------------------------------------------
# Copy path: distinct output buffers via direct HBM -> HBM DMA.
# ----------------------------------------------------------------------------
def _is_v7x():
    try:
        return "v7" in jax.devices()[0].device_kind.lower()
    except Exception:  # pragma: no cover - defensive
        return False


def _chunk_plan(leading_dim, nbytes, is_v7x,
                min_bytes_to_chunk=64 << 20, target_chunk_bytes=8 << 20,
                max_chunks=16):
    """Static (trace-time) plan of (start, size) slices along the leading dim.

    Single slice on v5e/v6e or for small tensors (one large DMA descriptor
    already saturates HBM there); multiple ~8 MiB chunks on v7x for large
    tensors so several DMA descriptors are in flight at once.
    """
    if (not is_v7x) or nbytes < min_bytes_to_chunk or leading_dim <= 1:
        return [(0, leading_dim)]
    n = max(1, min(leading_dim, max_chunks, -(-nbytes // target_chunk_bytes)))
    base, rem = divmod(leading_dim, n)
    slices, start = [], 0
    for i in range(n):
        size = base + (1 if i < rem else 0)
        slices.append((start, size))
        start += size
    return slices


def _make_hbm_copy_kernel(ctx_slices, x_slices, ctx_leading, x_leading):
    """Build a kernel that copies both tensors HBM->HBM with all DMAs in flight."""

    def kernel(ctx_in_ref, x_in_ref, ctx_out_ref, x_out_ref, copy_sems):
        copies = []
        sem_idx = 0
        for (start, size) in ctx_slices:
            if len(ctx_slices) == 1 and size == ctx_leading:
                src, dst = ctx_in_ref, ctx_out_ref
            else:
                src = ctx_in_ref.at[pl.ds(start, size)]
                dst = ctx_out_ref.at[pl.ds(start, size)]
            copies.append(pltpu.make_async_copy(src, dst, copy_sems.at[sem_idx]))
            sem_idx += 1
        for (start, size) in x_slices:
            if len(x_slices) == 1 and size == x_leading:
                src, dst = x_in_ref, x_out_ref
            else:
                src = x_in_ref.at[pl.ds(start, size)]
                dst = x_out_ref.at[pl.ds(start, size)]
            copies.append(pltpu.make_async_copy(src, dst, copy_sems.at[sem_idx]))
            sem_idx += 1
        # Start every descriptor before waiting on any: all transfers overlap.
        for cp in copies:
            cp.start()
        for cp in copies:
            cp.wait()

    return kernel


def mock_joint_block_forward_copy(context, x, c=None, params=None, *,
                                  force_pallas=False,
                                  small_fast_path_bytes=256 << 10):
    """Same semantics as forward, but returns freshly materialized buffers."""
    del c, params  # unused, matching the reference forward

    ctx_bytes = context.size * context.dtype.itemsize
    x_bytes = x.size * x.dtype.itemsize
    total_bytes = ctx_bytes + x_bytes

    # Small-size fast path: custom-call + DMA-setup latency would dominate;
    # XLA's native copy can be fused or elided entirely.
    if not force_pallas and total_bytes < small_fast_path_bytes:
        return jnp.copy(context), jnp.copy(x)

    is_v7x = _is_v7x()
    ctx_slices = _chunk_plan(context.shape[0], ctx_bytes, is_v7x)
    x_slices = _chunk_plan(x.shape[0], x_bytes, is_v7x)
    n_sems = len(ctx_slices) + len(x_slices)

    return pl.pallas_call(
        _make_hbm_copy_kernel(ctx_slices, x_slices,
                              context.shape[0], x.shape[0]),
        out_shape=(
            jax.ShapeDtypeStruct(context.shape, context.dtype),
            jax.ShapeDtypeStruct(x.shape, x.dtype),
        ),
        in_specs=[
            pl.BlockSpec(memory_space=pl.ANY),
            pl.BlockSpec(memory_space=pl.ANY),
        ],
        out_specs=(
            pl.BlockSpec(memory_space=pl.ANY),
            pl.BlockSpec(memory_space=pl.ANY),
        ),
        scratch_shapes=[pltpu.SemaphoreType.DMA((n_sems,))],
        cost_estimate=pl.CostEstimate(
            flops=0, transcendentals=0, bytes_accessed=2 * total_bytes
        ),
    )(context, x)


def init_params():
    # Deterministic init of the module's (unused) nn.Linear(1, 1) parameters.
    # They exist for parity with the PyTorch module but are never read.
    key = jax.random.PRNGKey(42)
    kw, kb = jax.random.split(key)
    weight = jax.random.uniform(kw, (1, 1), jnp.float32, -1.0, 1.0)
    bias = jax.random.uniform(kb, (1,), jnp.float32, -1.0, 1.0)
    return {"layer.weight": weight, "layer.bias": bias}


if __name__ == "__main__":
    key = jax.random.PRNGKey(0)
    k_ctx, k_x, k_c = jax.random.split(key, 3)

    B, S_ctx, S_x, H = 2, 8, 16, 32
    context = jax.random.normal(k_ctx, (B, S_ctx, H), dtype=jnp.float32)
    x = jax.random.normal(k_x, (B, S_x, H), dtype=jnp.float32)
    c = jax.random.normal(k_c, (B, H), dtype=jnp.float32)
    params = init_params()

    context_np = np.asarray(context)
    x_np = np.asarray(x)

    # 1) Primary path: plain identity — free, no custom call.
    out_context, out_x = mock_joint_block_forward(context, x, c, params)
    jax.block_until_ready((out_context, out_x))
    assert out_context.shape == context_np.shape and out_x.shape == x_np.shape
    assert out_context.dtype == context_np.dtype and out_x.dtype == x_np.dtype
    assert np.array_equal(np.asarray(out_context), context_np)
    assert np.array_equal(np.asarray(out_x), x_np)

    # 2) Copy path: force the Pallas HBM->HBM DMA kernel to exercise it
    #    (the tiny demo shapes would otherwise take the XLA fast path).
    out_context_c, out_x_c = mock_joint_block_forward_copy(
        context, x, c, params, force_pallas=True)
    jax.block_until_ready((out_context_c, out_x_c))
    assert out_context_c.shape == context_np.shape and out_x_c.shape == x_np.shape
    assert np.array_equal(np.asarray(out_context_c), context_np)
    assert np.array_equal(np.asarray(out_x_c), x_np)

    # 3) Copy path small-size fast path (XLA native copy, no custom call).
    out_context_s, out_x_s = mock_joint_block_forward_copy(context, x, c, params)
    jax.block_until_ready((out_context_s, out_x_s))
    assert np.array_equal(np.asarray(out_context_s), context_np)
    assert np.array_equal(np.asarray(out_x_s), x_np)

    print("KERNEL_OK")
</pallas_src>

<mosaic_0001>
module attributes {stable_mosaic.version = 11 : i64} {
  func.func @kernel(%arg0: memref<2x8x32xf32, #tpu.memory_space<any>>, %arg1: memref<2x16x32xf32, #tpu.memory_space<any>>, %arg2: memref<2x8x32xf32, #tpu.memory_space<any>>, %arg3: memref<2x16x32xf32, #tpu.memory_space<any>>, %arg4: memref<2x!tpu.dma_semaphore, #tpu.memory_space<semaphore_mem>>) attributes {dimension_semantics = [], scalar_prefetch = 0 : i64, scratch_operands = 1 : i64, tpu.core_type = #tpu.core_type<tc>} {
    %c0_i32 = arith.constant 0 : i32
    %0 = tpu.memref_slice %arg4[%c0_i32] : memref<2x!tpu.dma_semaphore, #tpu.memory_space<semaphore_mem>> -> memref<1x!tpu.dma_semaphore, #tpu.memory_space<semaphore_mem>>
    %1 = tpu.memref_squeeze %0 : memref<1x!tpu.dma_semaphore, #tpu.memory_space<semaphore_mem>> -> memref<!tpu.dma_semaphore, #tpu.memory_space<semaphore_mem>>
    tpu.enqueue_dma source(%arg0 : memref<2x8x32xf32, #tpu.memory_space<any>>) target(%arg2 : memref<2x8x32xf32, #tpu.memory_space<any>>) target_semaphore(%1 : memref<!tpu.dma_semaphore, #tpu.memory_space<semaphore_mem>>)
    %c1_i32 = arith.constant 1 : i32
    %2 = tpu.memref_slice %arg4[%c1_i32] : memref<2x!tpu.dma_semaphore, #tpu.memory_space<semaphore_mem>> -> memref<1x!tpu.dma_semaphore, #tpu.memory_space<semaphore_mem>>
    %3 = tpu.memref_squeeze %2 : memref<1x!tpu.dma_semaphore, #tpu.memory_space<semaphore_mem>> -> memref<!tpu.dma_semaphore, #tpu.memory_space<semaphore_mem>>
    tpu.enqueue_dma source(%arg1 : memref<2x16x32xf32, #tpu.memory_space<any>>) target(%arg3 : memref<2x16x32xf32, #tpu.memory_space<any>>) target_semaphore(%3 : memref<!tpu.dma_semaphore, #tpu.memory_space<semaphore_mem>>)
    %c0_i32_0 = arith.constant 0 : i32
    %4 = tpu.memref_slice %arg4[%c0_i32_0] : memref<2x!tpu.dma_semaphore, #tpu.memory_space<semaphore_mem>> -> memref<1x!tpu.dma_semaphore, #tpu.memory_space<semaphore_mem>>
    %5 = tpu.memref_squeeze %4 : memref<1x!tpu.dma_semaphore, #tpu.memory_space<semaphore_mem>> -> memref<!tpu.dma_semaphore, #tpu.memory_space<semaphore_mem>>
    tpu.wait_dma2 semaphore(%5 : memref<!tpu.dma_semaphore, #tpu.memory_space<semaphore_mem>>) src(%arg0 : memref<2x8x32xf32, #tpu.memory_space<any>>) dst(%arg2 : memref<2x8x32xf32, #tpu.memory_space<any>>)
    %c1_i32_1 = arith.constant 1 : i32
    %6 = tpu.memref_slice %arg4[%c1_i32_1] : memref<2x!tpu.dma_semaphore, #tpu.memory_space<semaphore_mem>> -> memref<1x!tpu.dma_semaphore, #tpu.memory_space<semaphore_mem>>
    %7 = tpu.memref_squeeze %6 : memref<1x!tpu.dma_semaphore, #tpu.memory_space<semaphore_mem>> -> memref<!tpu.dma_semaphore, #tpu.memory_space<semaphore_mem>>
    tpu.wait_dma2 semaphore(%7 : memref<!tpu.dma_semaphore, #tpu.memory_space<semaphore_mem>>) src(%arg1 : memref<2x16x32xf32, #tpu.memory_space<any>>) dst(%arg3 : memref<2x16x32xf32, #tpu.memory_space<any>>)
    return
  }
}

</mosaic_0001>

<llo_original>
// kernel: tpu_custom_call.1
$region0: #{tpu_custom_call.1}
  #allocation0 [shape = 'u32[]', space=smem, size = 0x4, offset = 0x4, fixed_abs, tag = 'smem constant byte address 0x4 - core index']
  #allocation1 [shape = 'u32[144,128]{1,0:T(1,128)}', space=vmem, size = 0x12000, scoped, tag = 'internal scratch']
  #allocation2 [shape = 's32[2]{0}', space=sflag, size = 0x8, scoped, tag = 'scratch operand']
  #allocation3 [shape = 's32[]', space=sflag, size = 0x4, offset = 0, fixed_abs, tag = 'sflag constant byte address 0x0 - dummy sync flag']
  #allocation4 [shape = 'u32[0]{0}', space=smem, size = 0, offset = 0, fixed_abs, tag = 'smem constant byte address 0x0 - null']
  #allocation5 [shape = 's32[]', space=sflag, size = 0x4, offset = 0, fixed_abs, tag = 'sflag constant byte address 0x0 - dummy sync flag']
  #allocation6 [shape = 'u32[0]{0}', space=smem, size = 0, offset = 0, fixed_abs, tag = 'smem constant byte address 0x0 - null']
  %s0 = inlined_call_operand.hbm [shape: f32[2,8,32], index: 0, kind: input, shape index: {}]
  %s1 = inlined_call_operand.hbm [shape: f32[2,16,32], index: 1, kind: input, shape index: {}]
  %s2 = inlined_call_operand.hbm [shape: f32[2,8,32], index: 2, kind: output, shape index: {0}]
  %s3 = inlined_call_operand.hbm [shape: f32[2,16,32], index: 3, kind: output, shape index: {1}]
  %4 = xla_tuple %s2, %s3
  %s5 = sld [smem:[#allocation0]]
  $region2: #{tpu_custom_call.1} parent=0
    _
  %s7 = ssub.s32 1, %s5
  %s8 = scalar_select 0, %s7, %s5
  %s10 = sshll.u32 1, 14
  %s11 = sxor.u32 4294967295, %s10
  %s14 = sshll.u32 3, 24
  %s15 = sxor.u32 4294967295, %s14
  %s16 = sand.u32 0, %s15
  %s18 = sor.u32 %s16, 0
  %21 = dma.general %s0, 256, %s2, [#allocation2], [#allocation3], [#allocation4], %s18, 0
  %s22 = scalar_lea.sflag [#allocation2], 1
  %s24 = sshll.u32 1, 14
  %s25 = sxor.u32 4294967295, %s24
  %s28 = sshll.u32 3, 24
  %s29 = sxor.u32 4294967295, %s28
  %s30 = sand.u32 0, %s29
  %s32 = sor.u32 %s30, 0
  %35 = dma.general %s1, 512, %s3, %s22, [#allocation5], [#allocation6], %s32, 0
  %s36 = smul.u32 2, 8
  %s37 = smul.u32 %s36, 1
  %s38 = sshll.u32 %s37, 4
  %39 = dma.done [#allocation2], %s38
  %s40 = smul.u32 2, 16
  %s41 = smul.u32 %s40, 1
  %s42 = sshll.u32 %s41, 4
  %43 = dma.done %s22, %s42
  %44 = vsyncmov [#allocation2]
  %s45 = vpop.sfrf %44
  %p46 = scmp.eq.s32.totalorder %s45, 0
  %p47 = pneg %p46
  %49 = shalt.err (%p47)
  %s50 = scalar_lea.sflag [#allocation2], 1
  %51 = vsyncmov %s50
  %s52 = vpop.sfrf %51
  %p53 = scmp.eq.s32.totalorder %s52, 0
  %p54 = pneg %p53
  %56 = shalt.err (%p54)

</llo_original>
